<compile_context>
chip_gen: v7x
topology: tpu7x:2x2x1
jax: 0.10.0
libtpu: 0.0.40
codegen_flags: <defaults>
</compile_context>

<pallas_src>
import functools

import jax
import jax.numpy as jnp
import numpy as np
from jax.experimental import pallas as pl
from jax.experimental.pallas import tpu as pltpu


def _pool_matmul_kernel(p_ref, x_ref, o_ref, *, inv_area):
    # p_ref: (Tp, T)   0/1 pooling-selection matrix (fetched once, Buffered(1))
    # x_ref: (T, Cc)   tokens of one batch element, one hidden-dim tile
    # o_ref: (Tp, Cc)
    acc = jnp.dot(p_ref[...], x_ref[...], preferred_element_type=jnp.float32)
    o_ref[...] = (acc * inv_area).astype(o_ref.dtype)


@functools.lru_cache(maxsize=None)
def _build_pool_matrix(L, window, dtype_name):
    """Dense (Tp, T) 0/1 selection matrix implementing the token gather of
    avg_pool2d(window, stride=window) on an LxL grid flattened row-major.
    Entries are exactly 1.0 (the 1/window^2 normalization happens after the
    f32 accumulation inside the kernel), so the matrix is exact in bf16 for
    any window size.  Built once per static config with numpy and cached."""
    Lp = L // window
    Tp, T = Lp * Lp, L * L
    oi, oj = np.divmod(np.arange(Tp), Lp)
    d = np.arange(window)
    rows = oi[:, None, None] * window + d[None, :, None]      # (Tp, w, 1)
    cols = oj[:, None, None] * window + d[None, None, :]      # (Tp, 1, w)
    tok = (rows * L + cols).reshape(Tp, window * window)       # (Tp, w*w)
    P = np.zeros((Tp, T), dtype=np.float32)
    P[np.arange(Tp)[:, None], tok] = 1.0
    return jnp.asarray(P, dtype=jnp.dtype(dtype_name))


def _pick_c_tile(C, B, T, Tp, x_isz, o_isz, p_bytes,
                 budget_bytes=28 << 20, min_steps=4):
    """Hidden-dim tile Cc: divides C, lane-dense multiple of 128, fits the
    VMEM budget with single-buffered P + double-buffered x/out tiles, and
    (when possible) keeps B*(C//Cc) >= min_steps so the BlockSpec pipeline
    hides DMA and the grid balances across two TensorCores (v7x)."""
    if C <= 128 or C % 128 != 0:
        return C  # small / non-lane-aligned hidden dims: take the whole thing

    def need(cc):
        return p_bytes + 2 * (T * cc * x_isz + Tp * cc * o_isz)

    candidates = [cc for cc in range(128, C + 1, 128) if C % cc == 0]
    fitting = [cc for cc in candidates if need(cc) <= budget_bytes] or [128]
    balanced = [cc for cc in fitting if B * (C // cc) >= min_steps]
    if balanced:
        return max(balanced)   # biggest tile that still gives enough steps
    return min(fitting)        # can't reach min_steps: maximize step count


def siglip_exit(x, num_mm_tokens_per_image, *, prefer_bf16=False):
    """x: (B, T, C) float array.  Returns (B, T', C) after average pooling of
    the LxL token grid down to num_mm_tokens_per_image tokens, or x itself if
    the token count already matches (identity branch of the PyTorch forward).

    prefer_bf16=True moves the data path (P and x) to bf16 with f32
    accumulation: ~2x less HBM traffic on the memory-bound kernel, at the
    cost of bf16 rounding of x (outputs differ from f32 at ~1e-2 relative)."""
    B, T, C = x.shape
    expected_length = num_mm_tokens_per_image ** 0.5
    current_length = int(T ** 0.5)
    if (current_length + 1) ** 2 <= T:   # guard against fp-sqrt truncation
        current_length += 1
    if float(current_length) == expected_length:
        return x  # identity branch of the PyTorch forward

    # Matches F.avg_pool2d floor behavior: edge tokens are dropped if
    # current_length is not an exact multiple of the window.
    window = int(current_length // expected_length)
    L = current_length
    Lp = L // window
    Tp = Lp * Lp
    inv_area = 1.0 / float(window * window)

    orig_dtype = x.dtype
    use_bf16 = (orig_dtype == jnp.bfloat16) or prefer_bf16
    compute_dtype = jnp.bfloat16 if use_bf16 else jnp.float32
    if x.dtype != compute_dtype:
        # Boundary cast: fuses into the producer and halves the kernel's HBM
        # read when moving f32 -> bf16.
        x = x.astype(compute_dtype)

    P = _build_pool_matrix(L, window, jnp.dtype(compute_dtype).name)

    x_isz = jnp.dtype(compute_dtype).itemsize
    o_isz = jnp.dtype(orig_dtype).itemsize
    p_bytes = Tp * T * x_isz                      # single-buffered (Buffered(1))

    Cc = _pick_c_tile(C, B, T, Tp, x_isz, o_isz, p_bytes)
    grid = (B, C // Cc)

    vmem_needed = p_bytes + 2 * (T * Cc * x_isz + Tp * Cc * o_isz)
    # Cap at 48 MiB so the budget is valid on v7x (64 MiB physical per TC).
    vmem_limit = int(min(max(vmem_needed + (4 << 20), 16 << 20), 48 << 20))

    cost = pl.CostEstimate(
        flops=2 * B * Tp * T * C,
        transcendentals=0,
        bytes_accessed=x_isz * B * T * C + o_isz * B * Tp * C + p_bytes,
    )

    kernel = functools.partial(_pool_matmul_kernel, inv_area=inv_area)

    out = pl.pallas_call(
        kernel,
        out_shape=jax.ShapeDtypeStruct((B, Tp, C), orig_dtype),
        grid_spec=pltpu.PrefetchScalarGridSpec(
            num_scalar_prefetch=0,
            grid=grid,
            in_specs=[
                # pooling matrix: constant index_map -> fetched once; a
                # single buffer is enough, freeing Tp*T bytes of VMEM.
                pl.BlockSpec((Tp, T), lambda b, c: (0, 0),
                             pipeline_mode=pl.Buffered(1)),
                # one batch element, one lane-dense hidden-dim tile
                pl.BlockSpec((pl.Squeezed(), T, Cc), lambda b, c: (b, 0, c)),
            ],
            out_specs=pl.BlockSpec(
                (pl.Squeezed(), Tp, Cc), lambda b, c: (b, 0, c)
            ),
        ),
        compiler_params=pltpu.CompilerParams(
            dimension_semantics=("parallel", "parallel"),
            vmem_limit_bytes=vmem_limit,
        ),
        cost_estimate=cost,
    )(P, x)
    return out


def _reference(x, num_mm_tokens_per_image):
    """Pure-JAX transcription of the PyTorch forward for verification."""
    B, T, C = x.shape
    expected_length = int(round(num_mm_tokens_per_image ** 0.5))
    L = int(round(T ** 0.5))
    if L == expected_length:
        return x
    w = L // expected_length
    xr = jnp.transpose(x, (0, 2, 1)).reshape(B, C, L, L)           # NCHW
    xr = xr.reshape(B, C, L // w, w, L // w, w).mean(axis=(3, 5))  # avg_pool2d
    xr = xr.reshape(B, C, -1)
    return jnp.transpose(xr, (0, 2, 1))


if __name__ == "__main__":
    key = jax.random.PRNGKey(0)
    B, L, C = 2, 8, 32                 # 8x8 = 64 input tokens, hidden = 32
    T = L * L
    num_mm_tokens_per_image = 16       # expected side 4 -> window 2 -> 16 tokens

    x = jax.random.normal(key, (B, T, C), dtype=jnp.float32)
    ref = _reference(x, num_mm_tokens_per_image)

    # Default exact f32 path: matches the PyTorch avg_pool2d numerics.
    y = jax.block_until_ready(siglip_exit(x, num_mm_tokens_per_image))
    assert y.shape == (B, num_mm_tokens_per_image, C), y.shape
    assert jnp.allclose(y, ref, atol=1e-5, rtol=1e-5), "f32 mismatch vs reference"

    # Opt-in bf16 data path (halves HBM traffic on the memory-bound kernel);
    # only difference vs f32 is the bf16 rounding of x.
    y_bf = jax.block_until_ready(
        siglip_exit(x, num_mm_tokens_per_image, prefer_bf16=True))
    assert y_bf.dtype == x.dtype
    assert jnp.allclose(y_bf, ref, atol=3e-2, rtol=3e-2), "bf16 path mismatch"

    # Native bf16 inputs use the bf16 path automatically.
    xb = x.astype(jnp.bfloat16)
    y_b = jax.block_until_ready(siglip_exit(xb, num_mm_tokens_per_image))
    assert y_b.dtype == jnp.bfloat16
    assert jnp.allclose(y_b.astype(jnp.float32), ref, atol=3e-2, rtol=3e-2)

    # Identity branch (token count already matches): no pooling.
    x_small = jax.random.normal(key, (B, num_mm_tokens_per_image, C), jnp.float32)
    y_small = jax.block_until_ready(siglip_exit(x_small, num_mm_tokens_per_image))
    assert jnp.array_equal(y_small, x_small)

    print("KERNEL_OK")
</pallas_src>

<mosaic_0001>
module attributes {stable_mosaic.version = 11 : i64} {
  func.func @_pool_matmul_kernel(%arg0: i32, %arg1: i32, %arg2: memref<16x64xf32, #tpu.memory_space<vmem>>, %arg3: memref<1x64x32xf32, #tpu.memory_space<vmem>>, %arg4: memref<1x16x32xf32, #tpu.memory_space<vmem>>) attributes {dimension_semantics = [#tpu.dimension_semantics<parallel>, #tpu.dimension_semantics<parallel>], iteration_bounds = array<i64: 2, 1>, scalar_prefetch = 0 : i64, scratch_operands = 0 : i64, tpu.core_type = #tpu.core_type<tc>, window_params = [{pipeline_mode = #tpu.pipeline_mode<synchronous>, transform_indices = @transform_0, window_bounds = array<i64: 16, 64>}, {transform_indices = @transform_1, window_bounds = array<i64: 1, 64, 32>}, {transform_indices = @transform_2, window_bounds = array<i64: 1, 16, 32>}]} {
    %c0 = arith.constant 0 : index
    %c0_0 = arith.constant 0 : index
    %0 = vector.load %arg2[%c0, %c0_0] : memref<16x64xf32, #tpu.memory_space<vmem>>, vector<16x64xf32>
    %c0_1 = arith.constant 0 : index
    %c0_2 = arith.constant 0 : index
    %c0_3 = arith.constant 0 : index
    %1 = vector.load %arg3[%c0_1, %c0_2, %c0_3] : memref<1x64x32xf32, #tpu.memory_space<vmem>>, vector<1x64x32xf32>
    %2 = vector.shape_cast %1 : vector<1x64x32xf32> to vector<64x32xf32>
    %cst = arith.constant dense<0.000000e+00> : vector<16x32xf32>
    %3 = tpu.matmul %0, %2, %cst {dimension_numbers = #tpu.dot_dimension_numbers<[1], [0], [0], [1], [0, 0, 1, 1], [], []>} : vector<16x64xf32>, vector<64x32xf32>, vector<16x32xf32> -> vector<16x32xf32>
    %cst_4 = arith.constant 2.500000e-01 : f32
    %4 = vector.broadcast %cst_4 : f32 to vector<16x32xf32>
    %5 = arith.mulf %3, %4 : vector<16x32xf32>
    %c0_5 = arith.constant 0 : index
    %c0_6 = arith.constant 0 : index
    %c0_7 = arith.constant 0 : index
    %6 = vector.load %arg4[%c0_5, %c0_6, %c0_7] : memref<1x16x32xf32, #tpu.memory_space<vmem>>, vector<1x16x32xf32>
    %7 = vector.shape_cast %6 : vector<1x16x32xf32> to vector<16x32xf32>
    %8 = vector.shape_cast %5 : vector<16x32xf32> to vector<1x16x32xf32>
    tpu.vector_store %arg4[%c0_5, %c0_6, %c0_7], %8 {strides = array<i32>} : memref<1x16x32xf32, #tpu.memory_space<vmem>>, vector<1x16x32xf32>,
    return
  }
  func.func @transform_0(%arg0: i32, %arg1: i32) -> (i32, i32) {
    %c0_i32 = arith.constant 0 : i32
    %c0_i32_0 = arith.constant 0 : i32
    %c0_i32_1 = arith.constant 0 : i32
    return %c0_i32, %c0_i32_0 : i32, i32
  }
  func.func @transform_1(%arg0: i32, %arg1: i32) -> (i32, i32, i32) {
    %c0_i32 = arith.constant 0 : i32
    %c0_i32_0 = arith.constant 0 : i32
    return %arg0, %c0_i32, %arg1 : i32, i32, i32
  }
  func.func @transform_2(%arg0: i32, %arg1: i32) -> (i32, i32, i32) {
    %c0_i32 = arith.constant 0 : i32
    %c0_i32_0 = arith.constant 0 : i32
    return %arg0, %c0_i32, %arg1 : i32, i32, i32
  }
}

</mosaic_0001>

<llo_original>
// kernel: tpu_custom_call.1
$region0: #{tpu_custom_call.1}
  #allocation0 [shape = 'u32[]', space=smem, size = 0x4, offset = 0x4, fixed_abs, tag = 'smem constant byte address 0x4 - core index']
  #allocation1 [shape = 'u32[144,128]{1,0:T(1,128)}', space=vmem, size = 0x12000, scoped, tag = 'internal scratch']
  %s0 = inlined_call_operand.vmem [shape: f32[16,64], index: 0, kind: input, shape index: {}]
  %s1 = inlined_call_operand.vmem [shape: f32[2,64,32], index: 1, kind: input, shape index: {}]
  %s2 = inlined_call_operand.hbm [shape: f32[2,16,32], index: 2, kind: output, shape index: {}]
  %s3 = sld [smem:[#allocation0]]
  $region41: #{tpu_custom_call.1} parent=0
    _
  %s5 = ssub.s32 1, %s3
  %s6 = scalar_select 0, %s5, %s3
  $region1: #{tpu_custom_call.1} parent=0
    #allocation2 [shape = 'u8[16384]{0}', space=vmem, size = 0x4000, scoped, tag = 'output window, operand 0']
    #allocation3 [shape = 's32[2]{0}', space=sflag, size = 0x8, scoped, tag = 'scoped memory for tpu_custom_call.1']
    %7 = vsyncpa [#allocation3], 0
    %s8 = scalar_lea.sflag [#allocation3], 1
    %9 = vsyncpa %s8, 0
    loop: start=0, step=1, limit=4
    $region2: #{tpu_custom_call.1} parent=1 // loop_pre_header
      _
    $region3: #{tpu_custom_call.1} parent=1 // loop_header
      %s11 = sphi 0, %s15
      %p12 = scmp.ge.s32.totalorder %s11, 4
      %s18 = sphi 0, %s30
      %s19 = sphi 0, %s26
      %s20 = sphi 0, %s18
      %s21 = sphi 0, %s19
      %s22 = sphi 0, %s20
      %s23 = sphi 0, %s21
      %s31 = sphi 0, %s31
      %s33 = sphi 0, %s31
      %s34 = sphi 0, %s33
      %s48 = sphi 0, %s34
      %s56 = sphi 0, %s58
      %s59 = sphi 0, %s56
      %s60 = sphi 0, %s59
      %s76 = sphi 0, %s60
      %s84 = sphi 0, %s86
      %s87 = sphi 0, %s84
      %s88 = sphi 0, %s87
      %s104 = sphi 0, %s88
    $region4: #{tpu_custom_call.1} parent=1 // loop_header_branch
      %14 = sbr.rel (%p12) target = $region8
    $region5: #{tpu_custom_call.1} parent=1 // loop_body
      %s16 = ssub.s32 %s11, 1
      %s17 = ssub.s32 %s11, 2
      %s24 = sadd.s32 1, %s19
      %p25 = scmp.ge.s32.totalorder %s24, 1
      %s26 = scalar_select %p25, 0, %s24
      %s27 = sadd.s32 1, %s18
      %s28 = scalar_select %p25, %s27, %s18
      %p29 = scmp.ge.s32.totalorder %s28, 2
      %s30 = scalar_select %p29, 0, %s28
      %s32 = sadd.s32 %s31, 1
      %p35 = scmp.eq.s32.totalorder %s11, 1
      %p36 = scmp.ne.s32.totalorder %s31, %s33
      %p37 = scmp.eq.s32.totalorder %s11, 0
      %p38 = por %p36, %p37
      %p39 = scmp.ne.s32.totalorder %s31, %s33
      %p40 = scmp.eq.s32.totalorder %s16, 1
      %p41 = por %p39, %p40
      %p42 = scmp.ne.s32.totalorder %s33, %s34
      %p43 = scmp.eq.s32.totalorder %s16, 0
      %p44 = por %p42, %p43
      %p45 = scmp.ne.s32.totalorder %s33, %s34
      %p46 = scmp.eq.s32.totalorder %s17, 1
      %p47 = por %p45, %p46
      %p49 = scmp.ne.s32.totalorder %s34, %s48
      %p50 = scmp.eq.s32.totalorder %s17, 0
      %p51 = por %p49, %p50
      %s52 = ssub.s32 %s18, %s30
      %s53 = ssub.s32 %s19, %s26
      %s54 = sor.u32 %s52, %s53
      %p55 = scmp.eq.s32.totalorder %s54, 0
      %s57 = sadd.s32 %s56, 1
      %s58 = scalar_select %p55, %s56, %s57
      %p61 = pneg %p55
      %p62 = scmp.eq.s32.totalorder %s11, 1
      %p63 = por %p61, %p62
      %p64 = scmp.ne.s32.totalorder %s56, %s59
      %p65 = scmp.eq.s32.totalorder %s11, 0
      %p66 = por %p64, %p65
      %p67 = scmp.ne.s32.totalorder %s56, %s59
      %p68 = scmp.eq.s32.totalorder %s16, 1
      %p69 = por %p67, %p68
      %p70 = scmp.ne.s32.totalorder %s59, %s60
      %p71 = scmp.eq.s32.totalorder %s16, 0
      %p72 = por %p70, %p71
      %p73 = scmp.ne.s32.totalorder %s59, %s60
      %p74 = scmp.eq.s32.totalorder %s17, 1
      %p75 = por %p73, %p74
      %p77 = scmp.ne.s32.totalorder %s60, %s76
      %p78 = scmp.eq.s32.totalorder %s17, 0
      %p79 = por %p77, %p78
      %s80 = ssub.s32 %s18, %s30
      %s81 = ssub.s32 %s19, %s26
      %s82 = sor.u32 %s80, %s81
      %p83 = scmp.eq.s32.totalorder %s82, 0
      %s85 = sadd.s32 %s84, 1
      %s86 = scalar_select %p83, %s84, %s85
      %p89 = pneg %p83
      %p90 = scmp.eq.s32.totalorder %s11, 1
      %p91 = por %p89, %p90
      %p92 = scmp.ne.s32.totalorder %s84, %s87
      %p93 = scmp.eq.s32.totalorder %s11, 0
      %p94 = por %p92, %p93
      %p95 = scmp.ne.s32.totalorder %s84, %s87
      %p96 = scmp.eq.s32.totalorder %s16, 1
      %p97 = por %p95, %p96
      %p98 = scmp.ne.s32.totalorder %s87, %s88
      %p99 = scmp.eq.s32.totalorder %s16, 0
      %p100 = por %p98, %p99
      %p101 = scmp.ne.s32.totalorder %s87, %s88
      %p102 = scmp.eq.s32.totalorder %s17, 1
      %p103 = por %p101, %p102
      %p105 = scmp.ne.s32.totalorder %s88, %s104
      %p106 = scmp.eq.s32.totalorder %s17, 0
      %p107 = por %p105, %p106
      %p108 = scmp.le.s32.totalorder 1, %s11
      %p109 = scmp.lt.s32.totalorder %s11, 3
      %p110 = pnand %p108, %p109
      %p111 = pneg %p110
      // Predicated region
      $region9: #{tpu_custom_call.1} parent=5 // pred_check
        _
      $region10: #{tpu_custom_call.1} parent=5 // pred_check_branch
        %113 = sbr.rel (%p110) target = $region12
      $region11: #{tpu_custom_call.1} parent=5 // pred_region
        %s114 = ssub.s32 %s11, 1
        // Predicated region
        $region13: #{tpu_custom_call.1} parent=11 // pred_check
          %p115 = pneg %p44
        $region14: #{tpu_custom_call.1} parent=11 // pred_check_branch
          %117 = sbr.rel (%p115) target = $region16
        $region15: #{tpu_custom_call.1} parent=11 // pred_region
          _
        $region16: #{tpu_custom_call.1} parent=11 // pred_fallthru
          _
      $region12: #{tpu_custom_call.1} parent=5 // pred_fallthru
        _
      %p118 = scmp.lt.s32.totalorder %s11, 2
      // Predicated region
      $region17: #{tpu_custom_call.1} parent=5 // pred_check
        %p119 = pneg %p118
      $region18: #{tpu_custom_call.1} parent=5 // pred_check_branch
        %121 = sbr.rel (%p119) target = $region20
      $region19: #{tpu_custom_call.1} parent=5 // pred_region
        // Predicated region
        $region21: #{tpu_custom_call.1} parent=19 // pred_check
          %p122 = pneg %p66
        $region22: #{tpu_custom_call.1} parent=19 // pred_check_branch
          %124 = sbr.rel (%p122) target = $region24
        $region23: #{tpu_custom_call.1} parent=19 // pred_region
          %p125 = scmp.lt.s32.totalorder %s18, 1
          %s126 = scalar_select %p125, %s18, 1
          %p127 = scmp.lt.s32.totalorder %s19, 0
          %s128 = scalar_select %p127, %s19, 0
          %s129 = smul.addr %s126, 8
          %s130 = sadd.s32 %s128, %s129
          %s131 = smul.addr %s130, 8
          %s132 = scalar_lea.vmem %s1, %s131
        $region24: #{tpu_custom_call.1} parent=19 // pred_fallthru
          _
      $region20: #{tpu_custom_call.1} parent=5 // pred_fallthru
        _
      %p133 = scmp.le.s32.totalorder 1, %s11
      %p134 = scmp.lt.s32.totalorder %s11, 3
      %p135 = pnand %p133, %p134
      %p136 = pneg %p135
      // Predicated region
      $region25: #{tpu_custom_call.1} parent=5 // pred_check
        _
      $region26: #{tpu_custom_call.1} parent=5 // pred_check_branch
        %138 = sbr.rel (%p135) target = $region28
      $region27: #{tpu_custom_call.1} parent=5 // pred_region
        %s139 = ssub.s32 %s11, 1
        %p140 = pneg %p44
        %p141 = pneg %p41
        %p142 = scmp.lt.s32.totalorder %s20, 1
        %s143 = scalar_select %p142, %s20, 1
        %p144 = scmp.lt.s32.totalorder %s21, 0
        %s145 = scalar_select %p144, %s21, 0
        %s146 = smul.addr %s143, 8
        %s147 = sadd.s32 %s145, %s146
        %s148 = smul.addr %s147, 8
        %s149 = scalar_lea.vmem %s1, %s148
        %p150 = pneg %p72
        %p151 = pneg %p69
        %p152 = pneg %p100
        %p153 = pneg %p97
        %s154 = sand.u32 %s87, 1
        %s155 = scalar_lea.sflag [#allocation3], %s154
        %s156 = sand.u32 %s87, 1
        %s157 = smul.addr %s156, 16
        %s158 = scalar_lea.vmem [#allocation2], %s157
        %p159 = scmp.lt.s32.totalorder %s20, 1
        %s160 = scalar_select %p159, %s20, 1
        %p161 = scmp.lt.s32.totalorder %s21, 0
        %s162 = scalar_select %p161, %s21, 0
        %s163 = smul.addr %s160, 8
        %s164 = sadd.s32 %s162, %s163
        %s165 = smul.addr %s164, 8
        %s166 = scalar_lea.vmem %s1, %s165
        %v167 = vld [vmem:[%s0] sm:$0xff]
        %v168 = vld [vmem:[%s0 + $0x8] sm:$0xff]
        %v169 = vld [vmem:[%s166] sm:$0xff]
        %v170 = vld [vmem:[%s166 + $0x8] sm:$0xff]
        %v171 = vld [vmem:[%s166 + $0x10] sm:$0xff]
        %v172 = vld [vmem:[%s166 + $0x18] sm:$0xff]
        %v173 = vld [vmem:[%s166 + $0x20] sm:$0xff]
        %v174 = vld [vmem:[%s166 + $0x28] sm:$0xff]
        %v175 = vld [vmem:[%s166 + $0x30] sm:$0xff]
        %v176 = vld [vmem:[%s166 + $0x38] sm:$0xff]
        %vm177 = vcmask 523264
        %v179 = vsel %vm177, %v167, 0
        %v182 = vsel %vm177, %v168, 0
        %184 = vmatprep.subr.mxu0 0.0
        %185 = vmatpush1.msra.mxu0 %v169
        %186 = vmatprep.subr.mxu0 0.0
        %187 = vmatpush1.msra.mxu0 %v170
        %188 = vmatprep.subr.mxu0 0.0
        %189 = vmatpush1.msra.mxu0 %v171
        %190 = vmatprep.subr.mxu0 0.0
        %191 = vmatpush1.msra.mxu0 %v172
        %192 = vmatprep.subr.mxu0 0.0
        %193 = vmatpush1.msra.mxu0 %v173
        %194 = vmatprep.subr.mxu0 0.0
        %195 = vmatpush1.msra.mxu0 %v174
        %196 = vmatprep.subr.mxu0 0.0
        %197 = vmatpush1.msra.mxu0 %v175
        %198 = vmatprep.subr.mxu0 0.0
        %199 = vmatpush1.msra.mxu0 %v176
        %200 = vmatprep.subr.mxu0 0.0
        %201 = vmatpush1.msra.mxu0 0.0
        %202 = vmatprep.subr.mxu0 0.0
        %203 = vmatpush1.msra.mxu0 0.0
        %204 = vmatprep.subr.mxu0 0.0
        %205 = vmatpush1.msra.mxu0 0.0
        %206 = vmatprep.subr.mxu0 0.0
        %207 = vmatpush1.msra.mxu0 0.0
        %208 = vmatprep.subr.mxu0 0.0
        %209 = vmatpush1.msra.mxu0 0.0
        %210 = vmatprep.subr.mxu0 0.0
        %211 = vmatpush1.msra.mxu0 0.0
        %212 = vmatprep.subr.mxu0 0.0
        %213 = vmatpush1.msra.mxu0 0.0
        %214 = vmatprep.subr.mxu0 0.0
        %215 = vmatpush1.msra.mxu0 0.0
        %216 = vmatprep.subr.mxu0 0.0
        %217 = vmatpush1.msra.mxu0 0.0
        %218 = vmatprep.subr.mxu0 0.0
        %219 = vmatpush1.msra.mxu0 0.0
        %220 = vmatprep.subr.mxu0 0.0
        %221 = vmatpush1.msra.mxu0 0.0
        %222 = vmatprep.subr.mxu0 0.0
        %223 = vmatpush1.msra.mxu0 0.0
        %224 = vmatprep.subr.mxu0 0.0
        %225 = vmatpush1.msra.mxu0 0.0
        %226 = vmatprep.subr.mxu0 0.0
        %227 = vmatpush1.msra.mxu0 0.0
        %228 = vmatprep.subr.mxu0 0.0
        %229 = vmatpush1.msra.mxu0 0.0
        %230 = vmatprep.subr.mxu0 0.0
        %231 = vmatpush1.msra.mxu0 0.0
        %232 = vmatprep.subr.mxu0 0.0
        %233 = vmatpush1.msra.mxu0 0.0
        %234 = vmatprep.subr.mxu0 0.0
        %235 = vmatpush1.msra.mxu0 0.0
        %236 = vmatprep.subr.mxu0 0.0
        %237 = vmatpush1.msra.mxu0 0.0
        %238 = vmatprep.subr.mxu0 0.0
        %239 = vmatpush1.msra.mxu0 0.0
        %240 = vmatprep.subr.mxu0 0.0
        %241 = vmatpush1.msra.mxu0 0.0
        %242 = vmatprep.subr.mxu0 0.0
        %243 = vmatpush1.msra.mxu0 0.0
        %244 = vmatprep.subr.mxu0 0.0
        %245 = vmatpush1.msra.mxu0 0.0
        %246 = vmatprep.subr.mxu0 0.0
        %247 = vmatpush1.msra.mxu0 0.0
        %248 = vmatprep.mubr.f32.mxu0 0.0
        %249 = vmatmul.mubr.f32.gmra.mrb[0].mxu0 %v179
        %v250 = vpop.f32.mrb[0].mxu0
        %v251 = vadd.f32 0.0, %v250
        %v252 = vpop.f32.mrb[0].mxu0
        %253 = vmatprep.mubr.f32.mxu0 0.0
        %254 = vmatmul.mubr.f32.gmra.mrb[0].mxu0 %v182
        %v255 = vpop.f32.mrb[0].mxu0
        %v256 = vadd.f32 0.0, %v255
        %v257 = vpop.f32.mrb[0].mxu0
        %258 = vdwg.mxu0
        %v259 = vmul.f32 %v251, 0.25
        %v260 = vmul.f32 %v256, 0.25
        %vm261 = vcmask 261120
        %262 = vst.msk [vmem:[%s158] sm:$0xff] %vm261, %v259
        %263 = vst.msk [vmem:[%s158 + $0x8] sm:$0xff] %vm261, %v260
        %s264 = sand.u32 %s87, 1
        %s265 = scalar_lea.sflag [#allocation3], %s264
        %s266 = sand.u32 %s87, 1
        %s267 = smul.addr %s266, 16
        %s268 = scalar_lea.vmem [#allocation2], %s267
        // Predicated region
        $region29: #{tpu_custom_call.1} parent=27 // pred_check
          %p269 = pneg %p97
        $region30: #{tpu_custom_call.1} parent=27 // pred_check_branch
          %271 = sbr.rel (%p269) target = $region32
        $region31: #{tpu_custom_call.1} parent=27 // pred_region
          %s273 = ssub.s32 256, 256
          %274 = vsyncadd %s265, %s273
          %s275 = smul.addr %s20, 2
          %s276 = sadd.s32 %s21, %s275
          %s277 = smul.addr %s276, 128
          %s278 = scalar_lea.hbm %s2, %s277
          %s279 = sshll.u32 %s268, 4
          %s280 = int_to_ptr.vmem [resolvable:$true] %s279
          %285 = dma.vmem_to_hbm [thread:$0]  %s280, 256, %s278, %s265, 128, 128, 8
        $region32: #{tpu_custom_call.1} parent=27 // pred_fallthru
          _
      $region28: #{tpu_custom_call.1} parent=5 // pred_fallthru
        _
      %p286 = scmp.le.s32.totalorder 2, %s11
      // Predicated region
      $region33: #{tpu_custom_call.1} parent=5 // pred_check
        %p287 = pneg %p286
      $region34: #{tpu_custom_call.1} parent=5 // pred_check_branch
        %289 = sbr.rel (%p287) target = $region36
      $region35: #{tpu_custom_call.1} parent=5 // pred_region
        %s290 = ssub.s32 %s11, 2
        // Predicated region
        $region37: #{tpu_custom_call.1} parent=35 // pred_check
          %p291 = pneg %p103
        $region38: #{tpu_custom_call.1} parent=35 // pred_check_branch
          %293 = sbr.rel (%p291) target = $region40
        $region39: #{tpu_custom_call.1} parent=35 // pred_region
          %s294 = sand.u32 %s88, 1
          %s295 = scalar_lea.sflag [#allocation3], %s294
          %s296 = sand.u32 %s88, 1
          %s297 = smul.addr %s296, 16
          %s298 = scalar_lea.vmem [#allocation2], %s297
          %299 = dma.done %s295, 256
        $region40: #{tpu_custom_call.1} parent=35 // pred_fallthru
          _
      $region36: #{tpu_custom_call.1} parent=5 // pred_fallthru
        _
    $region6: #{tpu_custom_call.1} parent=1 // loop_footer
      %s15 = sadd.s32 1, %s11
    $region7: #{tpu_custom_call.1} parent=1 // loop_footer_branch
      %10 = sbr.rel target = $region3
    $region8: #{tpu_custom_call.1} parent=1 // loop_exit
      _
    %300 = vsyncpa [#allocation3], 1
    %s301 = scalar_lea.sflag [#allocation3], 1
    %302 = vsyncpa %s301, 1

</llo_original>
